<compile_context>
chip_gen: v7x
topology: tpu7x:2x2x1
jax: 0.10.0
libtpu: 0.0.40
codegen_flags: <defaults>
</compile_context>

<pallas_src>
import jax
import jax.numpy as jnp
from jax.experimental import pallas as pl
from jax.experimental.pallas import tpu as pltpu


def _round_up(x, m):
    return ((x + m - 1) // m) * m


def _pseudo_label_loss_kernel(gaze_ref, ema_ref, partial_ref):
    gaze = gaze_ref[...]          # (TILE_R, N)
    ema = ema_ref[...]            # (TILE_R, N)
    if gaze.dtype != jnp.float32:  # no-op cast avoided for f32 inputs
        gaze = gaze.astype(jnp.float32)
        ema = ema.astype(jnp.float32)

    n = ema.shape[-1]
    inv_n = jnp.float32(1.0 / n)                                # static constant
    row_mean = jnp.sum(ema, axis=-1, keepdims=True) * inv_n     # (TILE_R, 1)
    row_abs = jnp.sum(jnp.abs(gaze - row_mean), axis=-1, keepdims=True)
    partial = jnp.sum(row_abs)                                  # scalar partial sum

    # Lane-dense (1, 8, 128) store; the wrapper only reads [:, 0, 0].
    partial_ref[...] = jnp.broadcast_to(partial, partial_ref.shape)


def pseudo_label_loss(gaze, gaze_ema):
    """Pallas implementation of PseudoLabelLoss.forward.

    gaze, gaze_ema: (B, 2, N) arrays. Returns a float32 scalar.
    """
    assert gaze.shape == gaze_ema.shape
    assert gaze.dtype == gaze_ema.dtype
    B, C, N = gaze.shape
    assert C == 2
    rows = B * C

    # Sublane-dense layout: (B, 2, N) -> (B*2, N).  Row-wise mean over the last
    # axis is identical to mean(dim=2) in the original layout.
    g2 = jnp.reshape(gaze, (rows, N))
    e2 = jnp.reshape(gaze_ema, (rows, N))

    itemsize = jnp.dtype(gaze.dtype).itemsize
    sublane = 8 * (4 // itemsize)          # 8 for f32, 16 for bf16
    # 2 inputs x 2 pipeline buffers x TILE_R x N x itemsize <= ~8 MiB
    vmem_budget = 8 * 1024 * 1024
    tile_r = vmem_budget // (4 * N * itemsize)
    tile_r = max(sublane, (tile_r // sublane) * sublane)
    tile_r = min(tile_r, _round_up(rows, sublane))

    rows_padded = _round_up(rows, tile_r)
    if rows_padded != rows:
        pad = rows_padded - rows
        # Zero rows contribute |0 - mean(0)| = 0 to the partial sums, so padding
        # is exact; the final divide uses the true element count.
        g2 = jnp.pad(g2, ((0, pad), (0, 0)))
        e2 = jnp.pad(e2, ((0, pad), (0, 0)))
    num_tiles = rows_padded // tile_r

    cost = pl.CostEstimate(
        flops=5 * rows * N,
        transcendentals=0,
        bytes_accessed=2 * rows * N * itemsize + num_tiles * 8 * 128 * 4,
    )

    partials = pl.pallas_call(
        _pseudo_label_loss_kernel,
        grid=(num_tiles,),
        in_specs=[
            pl.BlockSpec((tile_r, N), lambda i: (i, 0)),
            pl.BlockSpec((tile_r, N), lambda i: (i, 0)),
        ],
        out_specs=pl.BlockSpec((1, 8, 128), lambda i: (i, 0, 0)),
        out_shape=jax.ShapeDtypeStruct((num_tiles, 8, 128), jnp.float32),
        compiler_params=pltpu.CompilerParams(
            dimension_semantics=("parallel",),
        ),
        cost_estimate=cost,
    )(g2, e2)

    # Tiny final reduction + single scale in the wrapper (independent partials
    # keep the grid axis embarrassingly parallel for v7x's two TensorCores).
    total = jnp.sum(partials[:, 0, 0])
    return total * jnp.float32(1.0 / (rows * N))


def pseudo_label_loss_ref(gaze, gaze_ema):
    mean = jnp.mean(gaze_ema, axis=2).reshape(-1, 2, 1)
    return jnp.mean(jnp.abs(gaze - mean))


if __name__ == "__main__":
    key = jax.random.PRNGKey(0)
    # Small deterministic inputs: (batch, 2 gaze coords, seq).  Second case
    # exercises the row-padding path (rows not a multiple of 8, N not 128*k).
    for (B, C, N) in [(2, 2, 128), (3, 2, 100)]:
        key, k1, k2 = jax.random.split(key, 3)
        gaze = jax.random.normal(k1, (B, C, N), dtype=jnp.float32)
        gaze_ema = jax.random.normal(k2, (B, C, N), dtype=jnp.float32)

        loss = jax.block_until_ready(pseudo_label_loss(gaze, gaze_ema))
        ref = jax.block_until_ready(pseudo_label_loss_ref(gaze, gaze_ema))
        assert jnp.allclose(loss, ref, rtol=1e-5, atol=1e-6), (B, C, N, loss, ref)

    print("KERNEL_OK")
</pallas_src>

<mosaic_0001>
module attributes {stable_mosaic.version = 11 : i64} {
  func.func @_pseudo_label_loss_kernel(%arg0: i32, %arg1: memref<8x128xf32, #tpu.memory_space<vmem>>, %arg2: memref<8x128xf32, #tpu.memory_space<vmem>>, %arg3: memref<1x8x128xf32, #tpu.memory_space<vmem>>) attributes {dimension_semantics = [#tpu.dimension_semantics<parallel>], iteration_bounds = array<i64: 1>, scalar_prefetch = 0 : i64, scratch_operands = 0 : i64, tpu.core_type = #tpu.core_type<tc>, window_params = [{transform_indices = @transform_0, window_bounds = array<i64: 8, 128>}, {transform_indices = @transform_1, window_bounds = array<i64: 8, 128>}, {transform_indices = @transform_2, window_bounds = array<i64: 1, 8, 128>}]} {
    %c0 = arith.constant 0 : index
    %c0_0 = arith.constant 0 : index
    %0 = vector.load %arg1[%c0, %c0_0] : memref<8x128xf32, #tpu.memory_space<vmem>>, vector<8x128xf32>
    %c0_1 = arith.constant 0 : index
    %c0_2 = arith.constant 0 : index
    %1 = vector.load %arg2[%c0_1, %c0_2] : memref<8x128xf32, #tpu.memory_space<vmem>>, vector<8x128xf32>
    %cst = arith.constant dense<0.000000e+00> : vector<8xf32>
    %2 = vector.multi_reduction <add>, %1, %cst [1] : vector<8x128xf32> to vector<8xf32>
    %3 = vector.shape_cast %2 : vector<8xf32> to vector<8x1xf32>
    %cst_3 = arith.constant 7.812500e-03 : f32
    %4 = vector.broadcast %cst_3 : f32 to vector<8x1xf32>
    %5 = arith.mulf %3, %4 : vector<8x1xf32>
    %6 = vector.broadcast %5 : vector<8x1xf32> to vector<8x128xf32>
    %7 = arith.subf %0, %6 : vector<8x128xf32>
    %8 = math.absf %7 : vector<8x128xf32>
    %cst_4 = arith.constant dense<0.000000e+00> : vector<8xf32>
    %9 = vector.multi_reduction <add>, %8, %cst_4 [1] : vector<8x128xf32> to vector<8xf32>
    %10 = vector.shape_cast %9 : vector<8xf32> to vector<8x1xf32>
    %11 = vector.shape_cast %10 : vector<8x1xf32> to vector<1x8x1xf32>
    %cst_5 = arith.constant dense<0.000000e+00> : vector<1xf32>
    %12 = vector.multi_reduction <add>, %11, %cst_5 [1, 2] : vector<1x8x1xf32> to vector<1xf32>
    %13 = vector.shape_cast %12 : vector<1xf32> to vector<1x1x1xf32>
    %14 = vector.extract %13[0, 0, 0] : f32 from vector<1x1x1xf32>
    %15 = vector.broadcast %14 : f32 to vector<1x8x128xf32>
    %c0_6 = arith.constant 0 : index
    %c0_7 = arith.constant 0 : index
    %c0_8 = arith.constant 0 : index
    %16 = vector.load %arg3[%c0_6, %c0_7, %c0_8] : memref<1x8x128xf32, #tpu.memory_space<vmem>>, vector<1x8x128xf32>
    tpu.vector_store %arg3[%c0_6, %c0_7, %c0_8], %15 {strides = array<i32>} : memref<1x8x128xf32, #tpu.memory_space<vmem>>, vector<1x8x128xf32>,
    return
  }
  func.func @transform_0(%arg0: i32) -> (i32, i32) {
    %c0_i32 = arith.constant 0 : i32
    %c0_i32_0 = arith.constant 0 : i32
    return %arg0, %c0_i32 : i32, i32
  }
  func.func @transform_1(%arg0: i32) -> (i32, i32) {
    %c0_i32 = arith.constant 0 : i32
    %c0_i32_0 = arith.constant 0 : i32
    return %arg0, %c0_i32 : i32, i32
  }
  func.func @transform_2(%arg0: i32) -> (i32, i32, i32) {
    %c0_i32 = arith.constant 0 : i32
    %c0_i32_0 = arith.constant 0 : i32
    %c0_i32_1 = arith.constant 0 : i32
    return %arg0, %c0_i32, %c0_i32_0 : i32, i32, i32
  }
}

</mosaic_0001>

<llo_original>
// kernel: tpu_custom_call.1
$region0: #{tpu_custom_call.1}
  #allocation0 [shape = 'u32[]', space=smem, size = 0x4, offset = 0x4, fixed_abs, tag = 'smem constant byte address 0x4 - core index']
  #allocation1 [shape = 'u32[144,128]{1,0:T(1,128)}', space=vmem, size = 0x12000, scoped, tag = 'internal scratch']
  %s0 = inlined_call_operand.hbm [shape: f32[8,128], index: 0, kind: input, shape index: {}]
  %s1 = inlined_call_operand.hbm [shape: f32[8,128], index: 1, kind: input, shape index: {}]
  %s2 = inlined_call_operand.hbm [shape: f32[1,8,128], index: 2, kind: output, shape index: {}]
  %s3 = sld [smem:[#allocation0]]
  $region26: #{tpu_custom_call.1} parent=0
    _
  %s5 = ssub.s32 1, %s3
  %s6 = scalar_select 0, %s5, %s3
  $region1: #{tpu_custom_call.1} parent=0
    #allocation2 [shape = 'u8[4096]{0}', space=vmem, size = 0x1000, scoped, tag = 'input window, operand 0, single buffered']
    #allocation3 [shape = 's32[1]{0}', space=sflag, size = 0x4, scoped, tag = 'scoped memory for tpu_custom_call.1']
    #allocation4 [shape = 's32[1]{0}', space=sflag, size = 0x4, scoped, tag = 'scoped memory for tpu_custom_call.1']
    #allocation5 [shape = 'u8[4096]{0}', space=vmem, size = 0x1000, scoped, tag = 'input window, operand 1, single buffered']
    #allocation6 [shape = 's32[1]{0}', space=sflag, size = 0x4, scoped, tag = 'scoped memory for tpu_custom_call.1']
    #allocation7 [shape = 'u8[4096]{0}', space=vmem, size = 0x1000, scoped, tag = 'output window, operand 0, single buffered']
    %7 = vsyncpa [#allocation3], 0
    %8 = vsyncpa [#allocation6], 0
    %9 = vsyncpa [#allocation4], 0
    // Predicated region
    $region2: #{tpu_custom_call.1} parent=1 // pred_check
      _
    $region3: #{tpu_custom_call.1} parent=1 // pred_check_branch
      %11 = sbr.rel (0) target = $region5
    $region4: #{tpu_custom_call.1} parent=1 // pred_region
      %s13 = ssub.s32 128, 128
      %14 = vsyncadd [#allocation3], %s13
      %s16 = sshll.u32 [#allocation2], 4
      %s17 = int_to_ptr.vmem [resolvable:$true] %s16
      %19 = dma.hbm_to_vmem [thread:$0]  %s0, 128, %s17, [#allocation3]
    $region5: #{tpu_custom_call.1} parent=1 // pred_fallthru
      _
    // Predicated region
    $region6: #{tpu_custom_call.1} parent=1 // pred_check
      _
    $region7: #{tpu_custom_call.1} parent=1 // pred_check_branch
      %21 = sbr.rel (0) target = $region9
    $region8: #{tpu_custom_call.1} parent=1 // pred_region
      %s23 = ssub.s32 128, 128
      %24 = vsyncadd [#allocation6], %s23
      %s26 = sshll.u32 [#allocation5], 4
      %s27 = int_to_ptr.vmem [resolvable:$true] %s26
      %29 = dma.hbm_to_vmem [thread:$0]  %s1, 128, %s27, [#allocation6]
    $region9: #{tpu_custom_call.1} parent=1 // pred_fallthru
      _
    // Predicated region
    $region10: #{tpu_custom_call.1} parent=1 // pred_check
      _
    $region11: #{tpu_custom_call.1} parent=1 // pred_check_branch
      %31 = sbr.rel (0) target = $region13
    $region12: #{tpu_custom_call.1} parent=1 // pred_region
      %32 = dma.done [#allocation3], 128
    $region13: #{tpu_custom_call.1} parent=1 // pred_fallthru
      _
    // Predicated region
    $region14: #{tpu_custom_call.1} parent=1 // pred_check
      _
    $region15: #{tpu_custom_call.1} parent=1 // pred_check_branch
      %34 = sbr.rel (0) target = $region17
    $region16: #{tpu_custom_call.1} parent=1 // pred_region
      %35 = dma.done [#allocation6], 128
    $region17: #{tpu_custom_call.1} parent=1 // pred_fallthru
      _
    %v36 = vld [vmem:[#allocation2] sm:$0xff]
    %v37 = vld [vmem:[#allocation5] sm:$0xff]
    %38 = vadd.xlane.f32.xlu0 %v37
    %v39 = vpop.xlane.xlu0 %38
    %v40 = vmul.f32 %v39, 0.0078125
    %v41 = vsub.f32 %v36, %v40
    %v42 = vand.u32 2147483647, %v41
    %43 = vadd.xlane.f32.xlu0 %v42
    %v44 = vpop.xlane.xlu0 %43
    %vm45 = vcmask 7168
    %v46 = vsel %vm45, %v44, 0.0
    %47 = vadd.xlane.f32.xlu0 %v46
    %v48 = vpop.xlane.xlu0 %47
    %v49 = vrot.slane %v48, 4
    %v50 = vadd.f32 %v48, %v49
    %v51 = vrot.slane %v50, 2
    %v52 = vadd.f32 %v50, %v51
    %v53 = vrot.slane %v52, 1
    %v54 = vadd.f32 %v52, %v53
    %s55 = vtos %v54
    %v56 = vstv %s55
    %57 = vst [vmem:[#allocation7] sm:$0xff] %v56
    // Predicated region
    $region18: #{tpu_custom_call.1} parent=1 // pred_check
      _
    $region19: #{tpu_custom_call.1} parent=1 // pred_check_branch
      %59 = sbr.rel (0) target = $region21
    $region20: #{tpu_custom_call.1} parent=1 // pred_region
      %s61 = ssub.s32 128, 128
      %62 = vsyncadd [#allocation4], %s61
      %s64 = sshll.u32 [#allocation7], 4
      %s65 = int_to_ptr.vmem [resolvable:$true] %s64
      %67 = dma.vmem_to_hbm [thread:$0]  %s65, 128, %s2, [#allocation4]
    $region21: #{tpu_custom_call.1} parent=1 // pred_fallthru
      _
    // Predicated region
    $region22: #{tpu_custom_call.1} parent=1 // pred_check
      _
    $region23: #{tpu_custom_call.1} parent=1 // pred_check_branch
      %69 = sbr.rel (0) target = $region25
    $region24: #{tpu_custom_call.1} parent=1 // pred_region
      %70 = dma.done [#allocation4], 128
    $region25: #{tpu_custom_call.1} parent=1 // pred_fallthru
      _
    %71 = vsyncpa [#allocation3], 1
    %72 = vsyncpa [#allocation6], 1
    %73 = vsyncpa [#allocation4], 1

</llo_original>
